<compile_context>
chip_gen: v5e
topology: v5e:2x2
jax: 0.10.0
libtpu: 0.0.40
codegen_flags: <defaults>
</compile_context>

<pallas_src>
import jax
import jax.numpy as jnp
from jax.experimental import pallas as pl
from jax.experimental.pallas import tpu as pltpu

NUM_JOINTS = 14
IN_DIM = 256                 # fc1 input  (cat(g_vec, a_vec))
HID_DIM = 128                # fc1 output
OUT_DIM = NUM_JOINTS * 6 + 3 # 87 = fc2 output
GJ = 16                      # 14 joints padded to 16 lanes per component group


def _fused_kernel(g_ref, a_ref, w1g_ref, w1a_ref, b1_ref, w2s_ref, b2s_ref,
                  rot_ref, head_ref):
    """relu(g@W1g + a@W1a + b1) -> 7 component-grouped fc2 dots -> Gram-Schmidt."""
    # fc1 (K=256 split into two 128-wide dots; avoids concatenating g/a in HBM)
    h = jnp.dot(g_ref[...], w1g_ref[...], preferred_element_type=jnp.float32)
    h = h + jnp.dot(a_ref[...], w1a_ref[...], preferred_element_type=jnp.float32)
    h = jnp.maximum(h + b1_ref[...], 0.0)                          # (TN, 128)

    # fc2, one narrow dot per component group (columns pre-permuted component-major):
    # c = 0..5 -> ax, ay, az, bx, by, bz ; c = 6 -> head (3 valid lanes).
    comp = [jnp.dot(h, w2s_ref[c, :, :], preferred_element_type=jnp.float32)
            + b2s_ref[c, :, :] for c in range(7)]
    ax, ay, az, bx, by, bz, hd = comp                               # each (TN, 16)

    head_ref[...] = hd                                              # lanes 0..2 valid

    # Gram-Schmidt (F.normalize clamp: v / max(||v||, 1e-12)  ==  v * rsqrt(max(|v|^2, 1e-24)))
    eps2 = 1e-24
    inv_a = jax.lax.rsqrt(jnp.maximum(ax * ax + ay * ay + az * az, eps2))
    tx0 = ax * inv_a
    tx1 = ay * inv_a
    tx2 = az * inv_a

    cx = tx1 * bz - tx2 * by                                        # cross(tmp_x, b)
    cy = tx2 * bx - tx0 * bz
    cz = tx0 * by - tx1 * bx
    inv_c = jax.lax.rsqrt(jnp.maximum(cx * cx + cy * cy + cz * cz, eps2))
    tz0 = cx * inv_c
    tz1 = cy * inv_c
    tz2 = cz * inv_c

    ty0 = tz1 * tx2 - tz2 * tx1                                     # cross(tmp_z, tmp_x)
    ty1 = tz2 * tx0 - tz0 * tx2
    ty2 = tz0 * tx1 - tz1 * tx0

    # rot element e = 3*i + j : component i of column j (cols: 0=tmp_x, 1=tmp_y, 2=tmp_z)
    for e, v in enumerate((tx0, ty0, tz0, tx1, ty1, tz1, tx2, ty2, tz2)):
        rot_ref[e, :, :] = v


def combine_forward(g_vec, a_vec, params, batch_size, length_size):
    W1, b1, W2, b2 = params
    B, L = batch_size, length_size
    N = B * L

    g = g_vec.reshape(N, 128).astype(jnp.float32)
    a = a_vec.reshape(N, 128).astype(jnp.float32)

    # Row tile: 256 tokens (MXU M-dim on v6e/v7x); shrink for tiny inputs.
    TN = min(256, ((N + 7) // 8) * 8)
    Np = ((N + TN - 1) // TN) * TN
    if Np != N:
        g = jnp.pad(g, ((0, Np - N), (0, 0)))
        a = jnp.pad(a, ((0, Np - N), (0, 0)))

    # ---- weight prep (PyTorch Linear stores (out, in)); done once per call ----
    W1f = W1.astype(jnp.float32)
    W2f = W2.astype(jnp.float32)
    b2f = b2.astype(jnp.float32)
    w1g = W1f[:, :128].T                                            # (128, 128)
    w1a = W1f[:, 128:].T                                            # (128, 128)
    b1r = b1.reshape(1, HID_DIM).astype(jnp.float32)

    # fc2 columns regrouped component-major: group c gathers outputs {6*j + c, j=0..13};
    # group 6 = head (last 3 outputs).  Each group padded 14 -> 16 lanes with zeros.
    w2s = jnp.zeros((7, HID_DIM, GJ), jnp.float32)
    b2s = jnp.zeros((7, 1, GJ), jnp.float32)
    for c in range(6):
        w2s = w2s.at[c, :, :NUM_JOINTS].set(W2f[c:6 * NUM_JOINTS:6, :].T)
        b2s = b2s.at[c, 0, :NUM_JOINTS].set(b2f[c:6 * NUM_JOINTS:6])
    w2s = w2s.at[6, :, :3].set(W2f[6 * NUM_JOINTS:, :].T)
    b2s = b2s.at[6, 0, :3].set(b2f[6 * NUM_JOINTS:])

    rot9, head_p = pl.pallas_call(
        _fused_kernel,
        out_shape=(jax.ShapeDtypeStruct((9, Np, GJ), jnp.float32),
                   jax.ShapeDtypeStruct((Np, GJ), jnp.float32)),
        grid=(Np // TN,),
        in_specs=[
            pl.BlockSpec((TN, 128), lambda i: (i, 0)),              # g tile
            pl.BlockSpec((TN, 128), lambda i: (i, 0)),              # a tile
            pl.BlockSpec((HID_DIM, HID_DIM), lambda i: (0, 0)),     # w1g (resident)
            pl.BlockSpec((HID_DIM, HID_DIM), lambda i: (0, 0)),     # w1a (resident)
            pl.BlockSpec((1, HID_DIM), lambda i: (0, 0)),           # b1
            pl.BlockSpec((7, HID_DIM, GJ), lambda i: (0, 0, 0)),    # w2 (component stack)
            pl.BlockSpec((7, 1, GJ), lambda i: (0, 0, 0)),          # b2 (component stack)
        ],
        out_specs=(
            pl.BlockSpec((9, TN, GJ), lambda i: (0, i, 0)),         # rot elements
            pl.BlockSpec((TN, GJ), lambda i: (i, 0)),               # head (3 valid lanes)
        ),
        compiler_params=pltpu.CompilerParams(
            dimension_semantics=("parallel",)),
    )(g, a, w1g, w1a, b1r, w2s, b2s)

    head = head_p[:N, :3].reshape(B, L, 3)
    rot = jnp.transpose(rot9[:, :N, :NUM_JOINTS], (1, 2, 0))        # (N, 14, 9)
    rot = rot.reshape(B, L, NUM_JOINTS, 3, 3)                       # e = 3*i + j -> [i, j]
    return rot, head


# ---------------------------- pure-JAX reference ----------------------------
def _normalize(v, eps=1e-12):
    n = jnp.maximum(jnp.linalg.norm(v, axis=-1, keepdims=True), eps)
    return v / n


def reference(g_vec, a_vec, params, B, L):
    W1, b1, W2, b2 = params
    hp = jax.lax.Precision.HIGHEST
    x = jnp.concatenate([g_vec, a_vec], axis=-1)
    h = jnp.maximum(jnp.einsum("blf,hf->blh", x, W1, precision=hp) + b1, 0.0)
    y = jnp.einsum("blh,oh->blo", h, W2, precision=hp) + b2
    q = y[:, :, :6 * NUM_JOINTS].reshape(B * L * NUM_JOINTS, 6)
    tx = _normalize(q[:, :3])
    tz = _normalize(jnp.cross(tx, q[:, 3:]))
    ty = jnp.cross(tz, tx)
    rot = jnp.concatenate([tx[..., None], ty[..., None], tz[..., None]], axis=-1)
    rot = rot.reshape(B, L, NUM_JOINTS, 3, 3)
    head = y[:, :, -3:]
    return rot, head


if __name__ == "__main__":
    B, L = 2, 8
    key = jax.random.PRNGKey(0)
    k1, k2, k3, k4, k5, k6 = jax.random.split(key, 6)

    # deterministic synthetic parameters (shapes from nn.Linear(256,128) / nn.Linear(128,87))
    W1 = jax.random.normal(k1, (HID_DIM, IN_DIM), jnp.float32) / jnp.sqrt(IN_DIM)
    b1 = 0.01 * jax.random.normal(k2, (HID_DIM,), jnp.float32)
    W2 = jax.random.normal(k3, (OUT_DIM, HID_DIM), jnp.float32) / jnp.sqrt(HID_DIM)
    b2 = 0.01 * jax.random.normal(k4, (OUT_DIM,), jnp.float32)
    params = (W1, b1, W2, b2)

    g_vec = jax.random.normal(k5, (B, L, 128), jnp.float32)
    a_vec = jax.random.normal(k6, (B, L, 128), jnp.float32)

    fwd = jax.jit(combine_forward, static_argnums=(3, 4))
    rot, head = fwd(g_vec, a_vec, params, B, L)
    jax.block_until_ready((rot, head))

    rot_ref, head_ref = reference(g_vec, a_vec, params, B, L)
    assert rot.shape == (B, L, NUM_JOINTS, 3, 3) and head.shape == (B, L, 3)
    assert jnp.allclose(rot, rot_ref, atol=2e-3, rtol=2e-3)
    assert jnp.allclose(head, head_ref, atol=2e-3, rtol=2e-3)

    print("KERNEL_OK")
</pallas_src>

<mosaic_0001>
module attributes {stable_mosaic.version = 11 : i64} {
  func.func @_fused_kernel(%arg0: i32, %arg1: memref<16x128xf32, #tpu.memory_space<vmem>>, %arg2: memref<16x128xf32, #tpu.memory_space<vmem>>, %arg3: memref<128x128xf32, #tpu.memory_space<vmem>>, %arg4: memref<128x128xf32, #tpu.memory_space<vmem>>, %arg5: memref<1x128xf32, #tpu.memory_space<vmem>>, %arg6: memref<7x128x16xf32, #tpu.memory_space<vmem>>, %arg7: memref<7x1x16xf32, #tpu.memory_space<vmem>>, %arg8: memref<9x16x16xf32, #tpu.memory_space<vmem>>, %arg9: memref<16x16xf32, #tpu.memory_space<vmem>>) attributes {dimension_semantics = [#tpu.dimension_semantics<parallel>], iteration_bounds = array<i64: 1>, scalar_prefetch = 0 : i64, scratch_operands = 0 : i64, tpu.core_type = #tpu.core_type<tc>, window_params = [{transform_indices = @transform_0, window_bounds = array<i64: 16, 128>}, {transform_indices = @transform_1, window_bounds = array<i64: 16, 128>}, {pipeline_mode = #tpu.pipeline_mode<synchronous>, transform_indices = @transform_2, window_bounds = array<i64: 128, 128>}, {pipeline_mode = #tpu.pipeline_mode<synchronous>, transform_indices = @transform_3, window_bounds = array<i64: 128, 128>}, {pipeline_mode = #tpu.pipeline_mode<synchronous>, transform_indices = @transform_4, window_bounds = array<i64: 1, 128>}, {pipeline_mode = #tpu.pipeline_mode<synchronous>, transform_indices = @transform_5, window_bounds = array<i64: 7, 128, 16>}, {pipeline_mode = #tpu.pipeline_mode<synchronous>, transform_indices = @transform_6, window_bounds = array<i64: 7, 1, 16>}, {transform_indices = @transform_7, window_bounds = array<i64: 9, 16, 16>}, {transform_indices = @transform_8, window_bounds = array<i64: 16, 16>}]} {
    %c0 = arith.constant 0 : index
    %c0_0 = arith.constant 0 : index
    %0 = vector.load %arg1[%c0, %c0_0] : memref<16x128xf32, #tpu.memory_space<vmem>>, vector<16x128xf32>
    %c0_1 = arith.constant 0 : index
    %c0_2 = arith.constant 0 : index
    %1 = vector.load %arg3[%c0_1, %c0_2] : memref<128x128xf32, #tpu.memory_space<vmem>>, vector<128x128xf32>
    %cst = arith.constant dense<0.000000e+00> : vector<16x128xf32>
    %2 = tpu.matmul %0, %1, %cst {dimension_numbers = #tpu.dot_dimension_numbers<[1], [0], [0], [1], [0, 0, 1, 1], [], []>} : vector<16x128xf32>, vector<128x128xf32>, vector<16x128xf32> -> vector<16x128xf32>
    %c0_3 = arith.constant 0 : index
    %c0_4 = arith.constant 0 : index
    %3 = vector.load %arg2[%c0_3, %c0_4] : memref<16x128xf32, #tpu.memory_space<vmem>>, vector<16x128xf32>
    %c0_5 = arith.constant 0 : index
    %c0_6 = arith.constant 0 : index
    %4 = vector.load %arg4[%c0_5, %c0_6] : memref<128x128xf32, #tpu.memory_space<vmem>>, vector<128x128xf32>
    %cst_7 = arith.constant dense<0.000000e+00> : vector<16x128xf32>
    %5 = tpu.matmul %3, %4, %cst_7 {dimension_numbers = #tpu.dot_dimension_numbers<[1], [0], [0], [1], [0, 0, 1, 1], [], []>} : vector<16x128xf32>, vector<128x128xf32>, vector<16x128xf32> -> vector<16x128xf32>
    %6 = arith.addf %2, %5 : vector<16x128xf32>
    %c0_8 = arith.constant 0 : index
    %c0_9 = arith.constant 0 : index
    %7 = vector.load %arg5[%c0_8, %c0_9] : memref<1x128xf32, #tpu.memory_space<vmem>>, vector<1x128xf32>
    %8 = vector.broadcast %7 : vector<1x128xf32> to vector<16x128xf32>
    %9 = arith.addf %6, %8 : vector<16x128xf32>
    %cst_10 = arith.constant 0.000000e+00 : f32
    %10 = vector.broadcast %cst_10 : f32 to vector<16x128xf32>
    %11 = arith.maximumf %9, %10 : vector<16x128xf32>
    %c0_11 = arith.constant 0 : index
    %c0_12 = arith.constant 0 : index
    %c0_13 = arith.constant 0 : index
    %12 = vector.load %arg6[%c0_11, %c0_12, %c0_13] : memref<7x128x16xf32, #tpu.memory_space<vmem>>, vector<1x128x16xf32>
    %13 = vector.shape_cast %12 : vector<1x128x16xf32> to vector<128x16xf32>
    %cst_14 = arith.constant dense<0.000000e+00> : vector<16x16xf32>
    %14 = tpu.matmul %11, %13, %cst_14 {dimension_numbers = #tpu.dot_dimension_numbers<[1], [0], [0], [1], [0, 0, 1, 1], [], []>} : vector<16x128xf32>, vector<128x16xf32>, vector<16x16xf32> -> vector<16x16xf32>
    %c0_15 = arith.constant 0 : index
    %c0_16 = arith.constant 0 : index
    %c0_17 = arith.constant 0 : index
    %15 = vector.load %arg7[%c0_15, %c0_16, %c0_17] : memref<7x1x16xf32, #tpu.memory_space<vmem>>, vector<1x1x16xf32>
    %16 = vector.shape_cast %15 : vector<1x1x16xf32> to vector<1x16xf32>
    %17 = vector.broadcast %16 : vector<1x16xf32> to vector<16x16xf32>
    %18 = arith.addf %14, %17 : vector<16x16xf32>
    %c1 = arith.constant 1 : index
    %c0_18 = arith.constant 0 : index
    %c0_19 = arith.constant 0 : index
    %19 = vector.load %arg6[%c1, %c0_18, %c0_19] : memref<7x128x16xf32, #tpu.memory_space<vmem>>, vector<1x128x16xf32>
    %20 = vector.shape_cast %19 : vector<1x128x16xf32> to vector<128x16xf32>
    %cst_20 = arith.constant dense<0.000000e+00> : vector<16x16xf32>
    %21 = tpu.matmul %11, %20, %cst_20 {dimension_numbers = #tpu.dot_dimension_numbers<[1], [0], [0], [1], [0, 0, 1, 1], [], []>} : vector<16x128xf32>, vector<128x16xf32>, vector<16x16xf32> -> vector<16x16xf32>
    %c1_21 = arith.constant 1 : index
    %c0_22 = arith.constant 0 : index
    %c0_23 = arith.constant 0 : index
    %22 = vector.load %arg7[%c1_21, %c0_22, %c0_23] : memref<7x1x16xf32, #tpu.memory_space<vmem>>, vector<1x1x16xf32>
    %23 = vector.shape_cast %22 : vector<1x1x16xf32> to vector<1x16xf32>
    %24 = vector.broadcast %23 : vector<1x16xf32> to vector<16x16xf32>
    %25 = arith.addf %21, %24 : vector<16x16xf32>
    %c2 = arith.constant 2 : index
    %c0_24 = arith.constant 0 : index
    %c0_25 = arith.constant 0 : index
    %26 = vector.load %arg6[%c2, %c0_24, %c0_25] : memref<7x128x16xf32, #tpu.memory_space<vmem>>, vector<1x128x16xf32>
    %27 = vector.shape_cast %26 : vector<1x128x16xf32> to vector<128x16xf32>
    %cst_26 = arith.constant dense<0.000000e+00> : vector<16x16xf32>
    %28 = tpu.matmul %11, %27, %cst_26 {dimension_numbers = #tpu.dot_dimension_numbers<[1], [0], [0], [1], [0, 0, 1, 1], [], []>} : vector<16x128xf32>, vector<128x16xf32>, vector<16x16xf32> -> vector<16x16xf32>
    %c2_27 = arith.constant 2 : index
    %c0_28 = arith.constant 0 : index
    %c0_29 = arith.constant 0 : index
    %29 = vector.load %arg7[%c2_27, %c0_28, %c0_29] : memref<7x1x16xf32, #tpu.memory_space<vmem>>, vector<1x1x16xf32>
    %30 = vector.shape_cast %29 : vector<1x1x16xf32> to vector<1x16xf32>
    %31 = vector.broadcast %30 : vector<1x16xf32> to vector<16x16xf32>
    %32 = arith.addf %28, %31 : vector<16x16xf32>
    %c3 = arith.constant 3 : index
    %c0_30 = arith.constant 0 : index
    %c0_31 = arith.constant 0 : index
    %33 = vector.load %arg6[%c3, %c0_30, %c0_31] : memref<7x128x16xf32, #tpu.memory_space<vmem>>, vector<1x128x16xf32>
    %34 = vector.shape_cast %33 : vector<1x128x16xf32> to vector<128x16xf32>
    %cst_32 = arith.constant dense<0.000000e+00> : vector<16x16xf32>
    %35 = tpu.matmul %11, %34, %cst_32 {dimension_numbers = #tpu.dot_dimension_numbers<[1], [0], [0], [1], [0, 0, 1, 1], [], []>} : vector<16x128xf32>, vector<128x16xf32>, vector<16x16xf32> -> vector<16x16xf32>
    %c3_33 = arith.constant 3 : index
    %c0_34 = arith.constant 0 : index
    %c0_35 = arith.constant 0 : index
    %36 = vector.load %arg7[%c3_33, %c0_34, %c0_35] : memref<7x1x16xf32, #tpu.memory_space<vmem>>, vector<1x1x16xf32>
    %37 = vector.shape_cast %36 : vector<1x1x16xf32> to vector<1x16xf32>
    %38 = vector.broadcast %37 : vector<1x16xf32> to vector<16x16xf32>
    %39 = arith.addf %35, %38 : vector<16x16xf32>
    %c4 = arith.constant 4 : index
    %c0_36 = arith.constant 0 : index
    %c0_37 = arith.constant 0 : index
    %40 = vector.load %arg6[%c4, %c0_36, %c0_37] : memref<7x128x16xf32, #tpu.memory_space<vmem>>, vector<1x128x16xf32>
    %41 = vector.shape_cast %40 : vector<1x128x16xf32> to vector<128x16xf32>
    %cst_38 = arith.constant dense<0.000000e+00> : vector<16x16xf32>
    %42 = tpu.matmul %11, %41, %cst_38 {dimension_numbers = #tpu.dot_dimension_numbers<[1], [0], [0], [1], [0, 0, 1, 1], [], []>} : vector<16x128xf32>, vector<128x16xf32>, vector<16x16xf32> -> vector<16x16xf32>
    %c4_39 = arith.constant 4 : index
    %c0_40 = arith.constant 0 : index
    %c0_41 = arith.constant 0 : index
    %43 = vector.load %arg7[%c4_39, %c0_40, %c0_41] : memref<7x1x16xf32, #tpu.memory_space<vmem>>, vector<1x1x16xf32>
    %44 = vector.shape_cast %43 : vector<1x1x16xf32> to vector<1x16xf32>
    %45 = vector.broadcast %44 : vector<1x16xf32> to vector<16x16xf32>
    %46 = arith.addf %42, %45 : vector<16x16xf32>
    %c5 = arith.constant 5 : index
    %c0_42 = arith.constant 0 : index
    %c0_43 = arith.constant 0 : index
    %47 = vector.load %arg6[%c5, %c0_42, %c0_43] : memref<7x128x16xf32, #tpu.memory_space<vmem>>, vector<1x128x16xf32>
    %48 = vector.shape_cast %47 : vector<1x128x16xf32> to vector<128x16xf32>
    %cst_44 = arith.constant dense<0.000000e+00> : vector<16x16xf32>
    %49 = tpu.matmul %11, %48, %cst_44 {dimension_numbers = #tpu.dot_dimension_numbers<[1], [0], [0], [1], [0, 0, 1, 1], [], []>} : vector<16x128xf32>, vector<128x16xf32>, vector<16x16xf32> -> vector<16x16xf32>
    %c5_45 = arith.constant 5 : index
    %c0_46 = arith.constant 0 : index
    %c0_47 = arith.constant 0 : index
    %50 = vector.load %arg7[%c5_45, %c0_46, %c0_47] : memref<7x1x16xf32, #tpu.memory_space<vmem>>, vector<1x1x16xf32>
    %51 = vector.shape_cast %50 : vector<1x1x16xf32> to vector<1x16xf32>
    %52 = vector.broadcast %51 : vector<1x16xf32> to vector<16x16xf32>
    %53 = arith.addf %49, %52 : vector<16x16xf32>
    %c6 = arith.constant 6 : index
    %c0_48 = arith.constant 0 : index
    %c0_49 = arith.constant 0 : index
    %54 = vector.load %arg6[%c6, %c0_48, %c0_49] : memref<7x128x16xf32, #tpu.memory_space<vmem>>, vector<1x128x16xf32>
    %55 = vector.shape_cast %54 : vector<1x128x16xf32> to vector<128x16xf32>
    %cst_50 = arith.constant dense<0.000000e+00> : vector<16x16xf32>
    %56 = tpu.matmul %11, %55, %cst_50 {dimension_numbers = #tpu.dot_dimension_numbers<[1], [0], [0], [1], [0, 0, 1, 1], [], []>} : vector<16x128xf32>, vector<128x16xf32>, vector<16x16xf32> -> vector<16x16xf32>
    %c6_51 = arith.constant 6 : index
    %c0_52 = arith.constant 0 : index
    %c0_53 = arith.constant 0 : index
    %57 = vector.load %arg7[%c6_51, %c0_52, %c0_53] : memref<7x1x16xf32, #tpu.memory_space<vmem>>, vector<1x1x16xf32>
    %58 = vector.shape_cast %57 : vector<1x1x16xf32> to vector<1x16xf32>
    %59 = vector.broadcast %58 : vector<1x16xf32> to vector<16x16xf32>
    %60 = arith.addf %56, %59 : vector<16x16xf32>
    %c0_54 = arith.constant 0 : index
    %c0_55 = arith.constant 0 : index
    %61 = vector.load %arg9[%c0_54, %c0_55] : memref<16x16xf32, #tpu.memory_space<vmem>>, vector<16x16xf32>
    tpu.vector_store %arg9[%c0_54, %c0_55], %60 {strides = array<i32>} : memref<16x16xf32, #tpu.memory_space<vmem>>, vector<16x16xf32>,
    %62 = arith.mulf %18, %18 : vector<16x16xf32>
    %63 = arith.mulf %25, %25 : vector<16x16xf32>
    %64 = arith.addf %62, %63 : vector<16x16xf32>
    %65 = arith.mulf %32, %32 : vector<16x16xf32>
    %66 = arith.addf %64, %65 : vector<16x16xf32>
    %cst_56 = arith.constant 1.000000e-24 : f32
    %67 = vector.broadcast %cst_56 : f32 to vector<16x16xf32>
    %68 = arith.maximumf %66, %67 : vector<16x16xf32>
    %69 = math.rsqrt %68 : vector<16x16xf32>
    %70 = arith.mulf %18, %69 : vector<16x16xf32>
    %71 = arith.mulf %25, %69 : vector<16x16xf32>
    %72 = arith.mulf %32, %69 : vector<16x16xf32>
    %73 = arith.mulf %71, %53 : vector<16x16xf32>
    %74 = arith.mulf %72, %46 : vector<16x16xf32>
    %75 = arith.subf %73, %74 : vector<16x16xf32>
    %76 = arith.mulf %72, %39 : vector<16x16xf32>
    %77 = arith.mulf %70, %53 : vector<16x16xf32>
    %78 = arith.subf %76, %77 : vector<16x16xf32>
    %79 = arith.mulf %70, %46 : vector<16x16xf32>
    %80 = arith.mulf %71, %39 : vector<16x16xf32>
    %81 = arith.subf %79, %80 : vector<16x16xf32>
    %82 = arith.mulf %75, %75 : vector<16x16xf32>
    %83 = arith.mulf %78, %78 : vector<16x16xf32>
    %84 = arith.addf %82, %83 : vector<16x16xf32>
    %85 = arith.mulf %81, %81 : vector<16x16xf32>
    %86 = arith.addf %84, %85 : vector<16x16xf32>
    %cst_57 = arith.constant 1.000000e-24 : f32
    %87 = vector.broadcast %cst_57 : f32 to vector<16x16xf32>
    %88 = arith.maximumf %86, %87 : vector<16x16xf32>
    %89 = math.rsqrt %88 : vector<16x16xf32>
    %90 = arith.mulf %75, %89 : vector<16x16xf32>
    %91 = arith.mulf %78, %89 : vector<16x16xf32>
    %92 = arith.mulf %81, %89 : vector<16x16xf32>
    %93 = arith.mulf %91, %72 : vector<16x16xf32>
    %94 = arith.mulf %92, %71 : vector<16x16xf32>
    %95 = arith.subf %93, %94 : vector<16x16xf32>
    %96 = arith.mulf %92, %70 : vector<16x16xf32>
    %97 = arith.mulf %90, %72 : vector<16x16xf32>
    %98 = arith.subf %96, %97 : vector<16x16xf32>
    %99 = arith.mulf %90, %71 : vector<16x16xf32>
    %100 = arith.mulf %91, %70 : vector<16x16xf32>
    %101 = arith.subf %99, %100 : vector<16x16xf32>
    %c0_58 = arith.constant 0 : index
    %c0_59 = arith.constant 0 : index
    %c0_60 = arith.constant 0 : index
    %102 = vector.load %arg8[%c0_58, %c0_59, %c0_60] : memref<9x16x16xf32, #tpu.memory_space<vmem>>, vector<1x16x16xf32>
    %103 = vector.shape_cast %102 : vector<1x16x16xf32> to vector<16x16xf32>
    %104 = vector.shape_cast %70 : vector<16x16xf32> to vector<1x16x16xf32>
    tpu.vector_store %arg8[%c0_58, %c0_59, %c0_60], %104 {strides = array<i32>} : memref<9x16x16xf32, #tpu.memory_space<vmem>>, vector<1x16x16xf32>,
    %c1_61 = arith.constant 1 : index
    %c0_62 = arith.constant 0 : index
    %c0_63 = arith.constant 0 : index
    %105 = vector.load %arg8[%c1_61, %c0_62, %c0_63] : memref<9x16x16xf32, #tpu.memory_space<vmem>>, vector<1x16x16xf32>
    %106 = vector.shape_cast %105 : vector<1x16x16xf32> to vector<16x16xf32>
    %107 = vector.shape_cast %95 : vector<16x16xf32> to vector<1x16x16xf32>
    tpu.vector_store %arg8[%c1_61, %c0_62, %c0_63], %107 {strides = array<i32>} : memref<9x16x16xf32, #tpu.memory_space<vmem>>, vector<1x16x16xf32>,
    %c2_64 = arith.constant 2 : index
    %c0_65 = arith.constant 0 : index
    %c0_66 = arith.constant 0 : index
    %108 = vector.load %arg8[%c2_64, %c0_65, %c0_66] : memref<9x16x16xf32, #tpu.memory_space<vmem>>, vector<1x16x16xf32>
    %109 = vector.shape_cast %108 : vector<1x16x16xf32> to vector<16x16xf32>
    %110 = vector.shape_cast %90 : vector<16x16xf32> to vector<1x16x16xf32>
    tpu.vector_store %arg8[%c2_64, %c0_65, %c0_66], %110 {strides = array<i32>} : memref<9x16x16xf32, #tpu.memory_space<vmem>>, vector<1x16x16xf32>,
    %c3_67 = arith.constant 3 : index
    %c0_68 = arith.constant 0 : index
    %c0_69 = arith.constant 0 : index
    %111 = vector.load %arg8[%c3_67, %c0_68, %c0_69] : memref<9x16x16xf32, #tpu.memory_space<vmem>>, vector<1x16x16xf32>
    %112 = vector.shape_cast %111 : vector<1x16x16xf32> to vector<16x16xf32>
    %113 = vector.shape_cast %71 : vector<16x16xf32> to vector<1x16x16xf32>
    tpu.vector_store %arg8[%c3_67, %c0_68, %c0_69], %113 {strides = array<i32>} : memref<9x16x16xf32, #tpu.memory_space<vmem>>, vector<1x16x16xf32>,
    %c4_70 = arith.constant 4 : index
    %c0_71 = arith.constant 0 : index
    %c0_72 = arith.constant 0 : index
    %114 = vector.load %arg8[%c4_70, %c0_71, %c0_72] : memref<9x16x16xf32, #tpu.memory_space<vmem>>, vector<1x16x16xf32>
    %115 = vector.shape_cast %114 : vector<1x16x16xf32> to vector<16x16xf32>
    %116 = vector.shape_cast %98 : vector<16x16xf32> to vector<1x16x16xf32>
    tpu.vector_store %arg8[%c4_70, %c0_71, %c0_72], %116 {strides = array<i32>} : memref<9x16x16xf32, #tpu.memory_space<vmem>>, vector<1x16x16xf32>,
    %c5_73 = arith.constant 5 : index
    %c0_74 = arith.constant 0 : index
    %c0_75 = arith.constant 0 : index
    %117 = vector.load %arg8[%c5_73, %c0_74, %c0_75] : memref<9x16x16xf32, #tpu.memory_space<vmem>>, vector<1x16x16xf32>
    %118 = vector.shape_cast %117 : vector<1x16x16xf32> to vector<16x16xf32>
    %119 = vector.shape_cast %91 : vector<16x16xf32> to vector<1x16x16xf32>
    tpu.vector_store %arg8[%c5_73, %c0_74, %c0_75], %119 {strides = array<i32>} : memref<9x16x16xf32, #tpu.memory_space<vmem>>, vector<1x16x16xf32>,
    %c6_76 = arith.constant 6 : index
    %c0_77 = arith.constant 0 : index
    %c0_78 = arith.constant 0 : index
    %120 = vector.load %arg8[%c6_76, %c0_77, %c0_78] : memref<9x16x16xf32, #tpu.memory_space<vmem>>, vector<1x16x16xf32>
    %121 = vector.shape_cast %120 : vector<1x16x16xf32> to vector<16x16xf32>
    %122 = vector.shape_cast %72 : vector<16x16xf32> to vector<1x16x16xf32>
    tpu.vector_store %arg8[%c6_76, %c0_77, %c0_78], %122 {strides = array<i32>} : memref<9x16x16xf32, #tpu.memory_space<vmem>>, vector<1x16x16xf32>,
    %c7 = arith.constant 7 : index
    %c0_79 = arith.constant 0 : index
    %c0_80 = arith.constant 0 : index
    %123 = vector.load %arg8[%c7, %c0_79, %c0_80] : memref<9x16x16xf32, #tpu.memory_space<vmem>>, vector<1x16x16xf32>
    %124 = vector.shape_cast %123 : vector<1x16x16xf32> to vector<16x16xf32>
    %125 = vector.shape_cast %101 : vector<16x16xf32> to vector<1x16x16xf32>
    tpu.vector_store %arg8[%c7, %c0_79, %c0_80], %125 {strides = array<i32>} : memref<9x16x16xf32, #tpu.memory_space<vmem>>, vector<1x16x16xf32>,
    %c8 = arith.constant 8 : index
    %c0_81 = arith.constant 0 : index
    %c0_82 = arith.constant 0 : index
    %126 = vector.load %arg8[%c8, %c0_81, %c0_82] : memref<9x16x16xf32, #tpu.memory_space<vmem>>, vector<1x16x16xf32>
    %127 = vector.shape_cast %126 : vector<1x16x16xf32> to vector<16x16xf32>
    %128 = vector.shape_cast %92 : vector<16x16xf32> to vector<1x16x16xf32>
    tpu.vector_store %arg8[%c8, %c0_81, %c0_82], %128 {strides = array<i32>} : memref<9x16x16xf32, #tpu.memory_space<vmem>>, vector<1x16x16xf32>,
    return
  }
  func.func @transform_0(%arg0: i32) -> (i32, i32) {
    %c0_i32 = arith.constant 0 : i32
    %c0_i32_0 = arith.constant 0 : i32
    return %arg0, %c0_i32 : i32, i32
  }
  func.func @transform_1(%arg0: i32) -> (i32, i32) {
    %c0_i32 = arith.constant 0 : i32
    %c0_i32_0 = arith.constant 0 : i32
    return %arg0, %c0_i32 : i32, i32
  }
  func.func @transform_2(%arg0: i32) -> (i32, i32) {
    %c0_i32 = arith.constant 0 : i32
    %c0_i32_0 = arith.constant 0 : i32
    %c0_i32_1 = arith.constant 0 : i32
    return %c0_i32, %c0_i32_0 : i32, i32
  }
  func.func @transform_3(%arg0: i32) -> (i32, i32) {
    %c0_i32 = arith.constant 0 : i32
    %c0_i32_0 = arith.constant 0 : i32
    %c0_i32_1 = arith.constant 0 : i32
    return %c0_i32, %c0_i32_0 : i32, i32
  }
  func.func @transform_4(%arg0: i32) -> (i32, i32) {
    %c0_i32 = arith.constant 0 : i32
    %c0_i32_0 = arith.constant 0 : i32
    %c0_i32_1 = arith.constant 0 : i32
    return %c0_i32, %c0_i32_0 : i32, i32
  }
  func.func @transform_5(%arg0: i32) -> (i32, i32, i32) {
    %c0_i32 = arith.constant 0 : i32
    %c0_i32_0 = arith.constant 0 : i32
    %c0_i32_1 = arith.constant 0 : i32
    %c0_i32_2 = arith.constant 0 : i32
    return %c0_i32, %c0_i32_0, %c0_i32_1 : i32, i32, i32
  }
  func.func @transform_6(%arg0: i32) -> (i32, i32, i32) {
    %c0_i32 = arith.constant 0 : i32
    %c0_i32_0 = arith.constant 0 : i32
    %c0_i32_1 = arith.constant 0 : i32
    %c0_i32_2 = arith.constant 0 : i32
    return %c0_i32, %c0_i32_0, %c0_i32_1 : i32, i32, i32
  }
  func.func @transform_7(%arg0: i32) -> (i32, i32, i32) {
    %c0_i32 = arith.constant 0 : i32
    %c0_i32_0 = arith.constant 0 : i32
    %c0_i32_1 = arith.constant 0 : i32
    return %c0_i32, %arg0, %c0_i32_0 : i32, i32, i32
  }
  func.func @transform_8(%arg0: i32) -> (i32, i32) {
    %c0_i32 = arith.constant 0 : i32
    %c0_i32_0 = arith.constant 0 : i32
    return %arg0, %c0_i32 : i32, i32
  }
}

</mosaic_0001>

<llo_original>
// kernel: combine_forward.1
$region0: #{combine_forward.1}
  #allocation0 [shape = 'u32[]', space=smem, size = 0x4, offset = 0x4, fixed_abs, tag = 'smem constant byte address 0x4 - core index']
  #allocation1 [shape = 'u32[72,128]{1,0:T(1,128)}', space=vmem, size = 0x9000, scoped, tag = 'internal scratch']
  %s0 = inlined_call_operand.vmem [shape: f32[16,128], index: 0, kind: input, shape index: {}]
  %s1 = inlined_call_operand.vmem [shape: f32[16,128], index: 1, kind: input, shape index: {}]
  %s2 = inlined_call_operand.vmem [shape: f32[128,128], index: 2, kind: input, shape index: {}]
  %s3 = inlined_call_operand.vmem [shape: f32[128,128], index: 3, kind: input, shape index: {}]
  %s4 = inlined_call_operand.vmem [shape: f32[1,128], index: 4, kind: input, shape index: {}]
  %s5 = inlined_call_operand.vmem [shape: f32[7,128,16], index: 5, kind: input, shape index: {}]
  %s6 = inlined_call_operand.vmem [shape: f32[7,1,16], index: 6, kind: input, shape index: {}]
  %s7 = inlined_call_operand.vmem [shape: f32[9,16,16], index: 7, kind: output, shape index: {0}]
  %s8 = inlined_call_operand.vmem [shape: f32[16,16], index: 8, kind: output, shape index: {1}]
  %9 = xla_tuple %s7, %s8
  %s10 = sld [smem:[#allocation0]]
  $region46: #{combine_forward.1} parent=0
    _
  %s12 = ssub.s32 1, %s10
  %s13 = scalar_select 0, %s12, %s10
  // Predicated region
  $region2: #{combine_forward.1} parent=0 // pred_check
    _
  $region3: #{combine_forward.1} parent=0 // pred_check_branch
    %15 = sbr.rel (0) target = $region5
  $region4: #{combine_forward.1} parent=0 // pred_region
    _
  $region5: #{combine_forward.1} parent=0 // pred_fallthru
    _
  // Predicated region
  $region6: #{combine_forward.1} parent=0 // pred_check
    _
  $region7: #{combine_forward.1} parent=0 // pred_check_branch
    %17 = sbr.rel (0) target = $region9
  $region8: #{combine_forward.1} parent=0 // pred_region
    _
  $region9: #{combine_forward.1} parent=0 // pred_fallthru
    _
  // Predicated region
  $region10: #{combine_forward.1} parent=0 // pred_check
    _
  $region11: #{combine_forward.1} parent=0 // pred_check_branch
    %19 = sbr.rel (0) target = $region13
  $region12: #{combine_forward.1} parent=0 // pred_region
    _
  $region13: #{combine_forward.1} parent=0 // pred_fallthru
    _
  // Predicated region
  $region14: #{combine_forward.1} parent=0 // pred_check
    _
  $region15: #{combine_forward.1} parent=0 // pred_check_branch
    %21 = sbr.rel (0) target = $region17
  $region16: #{combine_forward.1} parent=0 // pred_region
    _
  $region17: #{combine_forward.1} parent=0 // pred_fallthru
    _
  // Predicated region
  $region18: #{combine_forward.1} parent=0 // pred_check
    _
  $region19: #{combine_forward.1} parent=0 // pred_check_branch
    %23 = sbr.rel (0) target = $region21
  $region20: #{combine_forward.1} parent=0 // pred_region
    _
  $region21: #{combine_forward.1} parent=0 // pred_fallthru
    _
  // Predicated region
  $region22: #{combine_forward.1} parent=0 // pred_check
    _
  $region23: #{combine_forward.1} parent=0 // pred_check_branch
    %25 = sbr.rel (0) target = $region25
  $region24: #{combine_forward.1} parent=0 // pred_region
    _
  $region25: #{combine_forward.1} parent=0 // pred_fallthru
    _
  // Predicated region
  $region26: #{combine_forward.1} parent=0 // pred_check
    _
  $region27: #{combine_forward.1} parent=0 // pred_check_branch
    %27 = sbr.rel (0) target = $region29
  $region28: #{combine_forward.1} parent=0 // pred_region
    _
  $region29: #{combine_forward.1} parent=0 // pred_fallthru
    _
  %v28 = vld [vmem:[%s0] sm:$0xff]
  %v29 = vld [vmem:[%s0 + $0x8] sm:$0xff]
  %v30 = vld [vmem:[%s2] sm:$0xff]
  %v31 = vld [vmem:[%s2 + $0x8] sm:$0xff]
  %v32 = vld [vmem:[%s2 + $0x10] sm:$0xff]
  %v33 = vld [vmem:[%s2 + $0x18] sm:$0xff]
  %v34 = vld [vmem:[%s2 + $0x20] sm:$0xff]
  %v35 = vld [vmem:[%s2 + $0x28] sm:$0xff]
  %v36 = vld [vmem:[%s2 + $0x30] sm:$0xff]
  %v37 = vld [vmem:[%s2 + $0x38] sm:$0xff]
  %v38 = vld [vmem:[%s2 + $0x40] sm:$0xff]
  %v39 = vld [vmem:[%s2 + $0x48] sm:$0xff]
  %v40 = vld [vmem:[%s2 + $0x50] sm:$0xff]
  %v41 = vld [vmem:[%s2 + $0x58] sm:$0xff]
  %v42 = vld [vmem:[%s2 + $0x60] sm:$0xff]
  %v43 = vld [vmem:[%s2 + $0x68] sm:$0xff]
  %v44 = vld [vmem:[%s2 + $0x70] sm:$0xff]
  %v45 = vld [vmem:[%s2 + $0x78] sm:$0xff]
  %v46 = vld [vmem:[%s1] sm:$0xff]
  %v47 = vld [vmem:[%s1 + $0x8] sm:$0xff]
  %v48 = vld [vmem:[%s3] sm:$0xff]
  %v49 = vld [vmem:[%s3 + $0x8] sm:$0xff]
  %v50 = vld [vmem:[%s3 + $0x10] sm:$0xff]
  %v51 = vld [vmem:[%s3 + $0x18] sm:$0xff]
  %v52 = vld [vmem:[%s3 + $0x20] sm:$0xff]
  %v53 = vld [vmem:[%s3 + $0x28] sm:$0xff]
  %v54 = vld [vmem:[%s3 + $0x30] sm:$0xff]
  %v55 = vld [vmem:[%s3 + $0x38] sm:$0xff]
  %v56 = vld [vmem:[%s3 + $0x40] sm:$0xff]
  %v57 = vld [vmem:[%s3 + $0x48] sm:$0xff]
  %v58 = vld [vmem:[%s3 + $0x50] sm:$0xff]
  %v59 = vld [vmem:[%s3 + $0x58] sm:$0xff]
  %v60 = vld [vmem:[%s3 + $0x60] sm:$0xff]
  %v61 = vld [vmem:[%s3 + $0x68] sm:$0xff]
  %v62 = vld [vmem:[%s3 + $0x70] sm:$0xff]
  %v63 = vld [vmem:[%s3 + $0x78] sm:$0xff]
  %64 = vmatpush.msra.mxu0 %v63
  %65 = vmatpush.msra.mxu0 %v62
  %66 = vmatpush.msra.mxu0 %v61
  %67 = vmatpush.msra.mxu0 %v60
  %68 = vmatpush.msra.mxu0 %v59
  %69 = vmatpush.msra.mxu0 %v58
  %70 = vmatpush.msra.mxu0 %v57
  %71 = vmatpush.msra.mxu0 %v56
  %72 = vmatpush.msra.mxu0 %v55
  %73 = vmatpush.msra.mxu0 %v54
  %74 = vmatpush.msra.mxu0 %v53
  %75 = vmatpush.msra.mxu0 %v52
  %76 = vmatpush.msra.mxu0 %v51
  %77 = vmatpush.msra.mxu0 %v50
  %78 = vmatpush.msra.mxu0 %v49
  %79 = vmatpush.msra.mxu0 %v48
  %80 = vmatmul.f32.gmra.mxu0 %v46
  %v81 = vpop.f32.mrf.mxu0
  %v82 = vadd.f32 0.0, %v81
  %83 = vmatmul.f32.gmra.mxu0 %v47
  %v84 = vpop.f32.mrf.mxu0
  %v85 = vadd.f32 0.0, %v84
  %86 = vdwg.mxu0
  %87 = vmatpush.msra.mxu0 %v45
  %88 = vmatpush.msra.mxu0 %v44
  %89 = vmatpush.msra.mxu0 %v43
  %90 = vmatpush.msra.mxu0 %v42
  %91 = vmatpush.msra.mxu0 %v41
  %92 = vmatpush.msra.mxu0 %v40
  %93 = vmatpush.msra.mxu0 %v39
  %94 = vmatpush.msra.mxu0 %v38
  %95 = vmatpush.msra.mxu0 %v37
  %96 = vmatpush.msra.mxu0 %v36
  %97 = vmatpush.msra.mxu0 %v35
  %98 = vmatpush.msra.mxu0 %v34
  %99 = vmatpush.msra.mxu0 %v33
  %100 = vmatpush.msra.mxu0 %v32
  %101 = vmatpush.msra.mxu0 %v31
  %102 = vmatpush.msra.mxu0 %v30
  %103 = vmatmul.f32.gmra.mxu0 %v28
  %v104 = vpop.f32.mrf.mxu0
  %v105 = vadd.f32 %v82, %v104
  %106 = vmatmul.f32.gmra.mxu0 %v29
  %v107 = vpop.f32.mrf.mxu0
  %v108 = vadd.f32 %v85, %v107
  %109 = vdwg.mxu0
  %v110 = vld [vmem:[%s4] sm:$0x1]
  %v112 = vperm.slane %v110, 0
  %v114 = vadd.f32 %v105, %v112
  %v115 = vadd.f32 %v108, %v112
  %v116 = vmax.f32 %v114, 0.0
  %v117 = vmax.f32 %v115, 0.0
  %v118 = vld [vmem:[%s5] sm:$0xff]
  %v119 = vld [vmem:[%s5 + $0x8] sm:$0xff]
  %v120 = vld [vmem:[%s5 + $0x10] sm:$0xff]
  %v121 = vld [vmem:[%s5 + $0x18] sm:$0xff]
  %v122 = vld [vmem:[%s5 + $0x20] sm:$0xff]
  %v123 = vld [vmem:[%s5 + $0x28] sm:$0xff]
  %v124 = vld [vmem:[%s5 + $0x30] sm:$0xff]
  %v125 = vld [vmem:[%s5 + $0x38] sm:$0xff]
  %v126 = vld [vmem:[%s5 + $0x40] sm:$0xff]
  %v127 = vld [vmem:[%s5 + $0x48] sm:$0xff]
  %v128 = vld [vmem:[%s5 + $0x50] sm:$0xff]
  %v129 = vld [vmem:[%s5 + $0x58] sm:$0xff]
  %v130 = vld [vmem:[%s5 + $0x60] sm:$0xff]
  %v131 = vld [vmem:[%s5 + $0x68] sm:$0xff]
  %v132 = vld [vmem:[%s5 + $0x70] sm:$0xff]
  %v133 = vld [vmem:[%s5 + $0x78] sm:$0xff]
  %v134 = vld [vmem:[%s6] sm:$0x1]
  %v136 = vperm.slane %v134, 0
  %138 = vmatpush.msra.mxu0 %v133
  %139 = vmatpush.msra.mxu0 %v132
  %140 = vmatpush.msra.mxu0 %v131
  %141 = vmatpush.msra.mxu0 %v130
  %142 = vmatpush.msra.mxu0 %v129
  %143 = vmatpush.msra.mxu0 %v128
  %144 = vmatpush.msra.mxu0 %v127
  %145 = vmatpush.msra.mxu0 %v126
  %146 = vmatpush.msra.mxu0 %v125
  %147 = vmatpush.msra.mxu0 %v124
  %148 = vmatpush.msra.mxu0 %v123
  %149 = vmatpush.msra.mxu0 %v122
  %150 = vmatpush.msra.mxu0 %v121
  %151 = vmatpush.msra.mxu0 %v120
  %152 = vmatpush.msra.mxu0 %v119
  %153 = vmatpush.msra.mxu0 %v118
  %154 = vmatmul.f32.gmra.mxu0 %v116
  %v155 = vpop.f32.mrf.mxu0
  %v156 = vadd.f32 %v136, %v155
  %157 = vmatmul.f32.gmra.mxu0 %v117
  %v158 = vpop.f32.mrf.mxu0
  %v159 = vadd.f32 %v136, %v158
  %160 = vdwg.mxu0
  %s161 = scalar_lea.vmem %s5, 128
  %v162 = vld [vmem:[%s161] sm:$0xff]
  %v163 = vld [vmem:[%s161 + $0x8] sm:$0xff]
  %v164 = vld [vmem:[%s161 + $0x10] sm:$0xff]
  %v165 = vld [vmem:[%s161 + $0x18] sm:$0xff]
  %v166 = vld [vmem:[%s161 + $0x20] sm:$0xff]
  %v167 = vld [vmem:[%s161 + $0x28] sm:$0xff]
  %v168 = vld [vmem:[%s161 + $0x30] sm:$0xff]
  %v169 = vld [vmem:[%s161 + $0x38] sm:$0xff]
  %v170 = vld [vmem:[%s161 + $0x40] sm:$0xff]
  %v171 = vld [vmem:[%s161 + $0x48] sm:$0xff]
  %v172 = vld [vmem:[%s161 + $0x50] sm:$0xff]
  %v173 = vld [vmem:[%s161 + $0x58] sm:$0xff]
  %v174 = vld [vmem:[%s161 + $0x60] sm:$0xff]
  %v175 = vld [vmem:[%s161 + $0x68] sm:$0xff]
  %v176 = vld [vmem:[%s161 + $0x70] sm:$0xff]
  %v177 = vld [vmem:[%s161 + $0x78] sm:$0xff]
  %s178 = scalar_lea.vmem %s6, 1
  %v179 = vld [vmem:[%s178] sm:$0x1]
  %v181 = vperm.slane %v179, 0
  %183 = vmatpush.msra.mxu0 %v177
  %184 = vmatpush.msra.mxu0 %v176
  %185 = vmatpush.msra.mxu0 %v175
  %186 = vmatpush.msra.mxu0 %v174
  %187 = vmatpush.msra.mxu0 %v173
  %188 = vmatpush.msra.mxu0 %v172
  %189 = vmatpush.msra.mxu0 %v171
  %190 = vmatpush.msra.mxu0 %v170
  %191 = vmatpush.msra.mxu0 %v169
  %192 = vmatpush.msra.mxu0 %v168
  %193 = vmatpush.msra.mxu0 %v167
  %194 = vmatpush.msra.mxu0 %v166
  %195 = vmatpush.msra.mxu0 %v165
  %196 = vmatpush.msra.mxu0 %v164
  %197 = vmatpush.msra.mxu0 %v163
  %198 = vmatpush.msra.mxu0 %v162
  %199 = vmatmul.f32.gmra.mxu0 %v116
  %v200 = vpop.f32.mrf.mxu0
  %v201 = vadd.f32 %v181, %v200
  %202 = vmatmul.f32.gmra.mxu0 %v117
  %v203 = vpop.f32.mrf.mxu0
  %v204 = vadd.f32 %v181, %v203
  %205 = vdwg.mxu0
  %s206 = scalar_lea.vmem %s5, 256
  %v207 = vld [vmem:[%s206] sm:$0xff]
  %v208 = vld [vmem:[%s206 + $0x8] sm:$0xff]
  %v209 = vld [vmem:[%s206 + $0x10] sm:$0xff]
  %v210 = vld [vmem:[%s206 + $0x18] sm:$0xff]
  %v211 = vld [vmem:[%s206 + $0x20] sm:$0xff]
  %v212 = vld [vmem:[%s206 + $0x28] sm:$0xff]
  %v213 = vld [vmem:[%s206 + $0x30] sm:$0xff]
  %v214 = vld [vmem:[%s206 + $0x38] sm:$0xff]
  %v215 = vld [vmem:[%s206 + $0x40] sm:$0xff]
  %v216 = vld [vmem:[%s206 + $0x48] sm:$0xff]
  %v217 = vld [vmem:[%s206 + $0x50] sm:$0xff]
  %v218 = vld [vmem:[%s206 + $0x58] sm:$0xff]
  %v219 = vld [vmem:[%s206 + $0x60] sm:$0xff]
  %v220 = vld [vmem:[%s206 + $0x68] sm:$0xff]
  %v221 = vld [vmem:[%s206 + $0x70] sm:$0xff]
  %v222 = vld [vmem:[%s206 + $0x78] sm:$0xff]
  %s223 = scalar_lea.vmem %s6, 2
  %v224 = vld [vmem:[%s223] sm:$0x1]
  %v226 = vperm.slane %v224, 0
  %228 = vmatpush.msra.mxu0 %v222
  %229 = vmatpush.msra.mxu0 %v221
  %230 = vmatpush.msra.mxu0 %v220
  %231 = vmatpush.msra.mxu0 %v219
  %232 = vmatpush.msra.mxu0 %v218
  %233 = vmatpush.msra.mxu0 %v217
  %234 = vmatpush.msra.mxu0 %v216
  %235 = vmatpush.msra.mxu0 %v215
  %236 = vmatpush.msra.mxu0 %v214
  %237 = vmatpush.msra.mxu0 %v213
  %238 = vmatpush.msra.mxu0 %v212
  %239 = vmatpush.msra.mxu0 %v211
  %240 = vmatpush.msra.mxu0 %v210
  %241 = vmatpush.msra.mxu0 %v209
  %242 = vmatpush.msra.mxu0 %v208
  %243 = vmatpush.msra.mxu0 %v207
  %244 = vmatmul.f32.gmra.mxu0 %v116
  %v245 = vpop.f32.mrf.mxu0
  %v246 = vadd.f32 %v226, %v245
  %247 = vmatmul.f32.gmra.mxu0 %v117
  %v248 = vpop.f32.mrf.mxu0
  %v249 = vadd.f32 %v226, %v248
  %250 = vdwg.mxu0
  %s251 = scalar_lea.vmem %s5, 384
  %v252 = vld [vmem:[%s251] sm:$0xff]
  %v253 = vld [vmem:[%s251 + $0x8] sm:$0xff]
  %v254 = vld [vmem:[%s251 + $0x10] sm:$0xff]
  %v255 = vld [vmem:[%s251 + $0x18] sm:$0xff]
  %v256 = vld [vmem:[%s251 + $0x20] sm:$0xff]
  %v257 = vld [vmem:[%s251 + $0x28] sm:$0xff]
  %v258 = vld [vmem:[%s251 + $0x30] sm:$0xff]
  %v259 = vld [vmem:[%s251 + $0x38] sm:$0xff]
  %v260 = vld [vmem:[%s251 + $0x40] sm:$0xff]
  %v261 = vld [vmem:[%s251 + $0x48] sm:$0xff]
  %v262 = vld [vmem:[%s251 + $0x50] sm:$0xff]
  %v263 = vld [vmem:[%s251 + $0x58] sm:$0xff]
  %v264 = vld [vmem:[%s251 + $0x60] sm:$0xff]
  %v265 = vld [vmem:[%s251 + $0x68] sm:$0xff]
  %v266 = vld [vmem:[%s251 + $0x70] sm:$0xff]
  %v267 = vld [vmem:[%s251 + $0x78] sm:$0xff]
  %s268 = scalar_lea.vmem %s6, 3
  %v269 = vld [vmem:[%s268] sm:$0x1]
  %v271 = vperm.slane %v269, 0
  %273 = vmatpush.msra.mxu0 %v267
  %274 = vmatpush.msra.mxu0 %v266
  %275 = vmatpush.msra.mxu0 %v265
  %276 = vmatpush.msra.mxu0 %v264
  %277 = vmatpush.msra.mxu0 %v263
  %278 = vmatpush.msra.mxu0 %v262
  %279 = vmatpush.msra.mxu0 %v261
  %280 = vmatpush.msra.mxu0 %v260
  %281 = vmatpush.msra.mxu0 %v259
  %282 = vmatpush.msra.mxu0 %v258
  %283 = vmatpush.msra.mxu0 %v257
  %284 = vmatpush.msra.mxu0 %v256
  %285 = vmatpush.msra.mxu0 %v255
  %286 = vmatpush.msra.mxu0 %v254
  %287 = vmatpush.msra.mxu0 %v253
  %288 = vmatpush.msra.mxu0 %v252
  %289 = vmatmul.f32.gmra.mxu0 %v116
  %v290 = vpop.f32.mrf.mxu0
  %v291 = vadd.f32 %v271, %v290
  %292 = vmatmul.f32.gmra.mxu0 %v117
  %v293 = vpop.f32.mrf.mxu0
  %v294 = vadd.f32 %v271, %v293
  %295 = vdwg.mxu0
  %s296 = scalar_lea.vmem %s5, 512
  %v297 = vld [vmem:[%s296] sm:$0xff]
  %v298 = vld [vmem:[%s296 + $0x8] sm:$0xff]
  %v299 = vld [vmem:[%s296 + $0x10] sm:$0xff]
  %v300 = vld [vmem:[%s296 + $0x18] sm:$0xff]
  %v301 = vld [vmem:[%s296 + $0x20] sm:$0xff]
  %v302 = vld [vmem:[%s296 + $0x28] sm:$0xff]
  %v303 = vld [vmem:[%s296 + $0x30] sm:$0xff]
  %v304 = vld [vmem:[%s296 + $0x38] sm:$0xff]
  %v305 = vld [vmem:[%s296 + $0x40] sm:$0xff]
  %v306 = vld [vmem:[%s296 + $0x48] sm:$0xff]
  %v307 = vld [vmem:[%s296 + $0x50] sm:$0xff]
  %v308 = vld [vmem:[%s296 + $0x58] sm:$0xff]
  %v309 = vld [vmem:[%s296 + $0x60] sm:$0xff]
  %v310 = vld [vmem:[%s296 + $0x68] sm:$0xff]
  %v311 = vld [vmem:[%s296 + $0x70] sm:$0xff]
  %v312 = vld [vmem:[%s296 + $0x78] sm:$0xff]
  %s313 = scalar_lea.vmem %s6, 4
  %v314 = vld [vmem:[%s313] sm:$0x1]
  %v316 = vperm.slane %v314, 0
  %318 = vmatpush.msra.mxu0 %v312
  %319 = vmatpush.msra.mxu0 %v311
  %320 = vmatpush.msra.mxu0 %v310
  %321 = vmatpush.msra.mxu0 %v309
  %322 = vmatpush.msra.mxu0 %v308
  %323 = vmatpush.msra.mxu0 %v307
  %324 = vmatpush.msra.mxu0 %v306
  %325 = vmatpush.msra.mxu0 %v305
  %326 = vmatpush.msra.mxu0 %v304
  %327 = vmatpush.msra.mxu0 %v303
  %328 = vmatpush.msra.mxu0 %v302
  %329 = vmatpush.msra.mxu0 %v301
  %330 = vmatpush.msra.mxu0 %v300
  %331 = vmatpush.msra.mxu0 %v299
  %332 = vmatpush.msra.mxu0 %v298
  %333 = vmatpush.msra.mxu0 %v297
  %334 = vmatmul.f32.gmra.mxu0 %v116
  %v335 = vpop.f32.mrf.mxu0
  %v336 = vadd.f32 %v316, %v335
  %337 = vmatmul.f32.gmra.mxu0 %v117
  %v338 = vpop.f32.mrf.mxu0
  %v339 = vadd.f32 %v316, %v338
  %340 = vdwg.mxu0
  %s341 = scalar_lea.vmem %s5, 640
  %v342 = vld [vmem:[%s341] sm:$0xff]
  %v343 = vld [vmem:[%s341 + $0x8] sm:$0xff]
  %v344 = vld [vmem:[%s341 + $0x10] sm:$0xff]
  %v345 = vld [vmem:[%s341 + $0x18] sm:$0xff]
  %v346 = vld [vmem:[%s341 + $0x20] sm:$0xff]
  %v347 = vld [vmem:[%s341 + $0x28] sm:$0xff]
  %v348 = vld [vmem:[%s341 + $0x30] sm:$0xff]
  %v349 = vld [vmem:[%s341 + $0x38] sm:$0xff]
  %v350 = vld [vmem:[%s341 + $0x40] sm:$0xff]
  %v351 = vld [vmem:[%s341 + $0x48] sm:$0xff]
  %v352 = vld [vmem:[%s341 + $0x50] sm:$0xff]
  %v353 = vld [vmem:[%s341 + $0x58] sm:$0xff]
  %v354 = vld [vmem:[%s341 + $0x60] sm:$0xff]
  %v355 = vld [vmem:[%s341 + $0x68] sm:$0xff]
  %v356 = vld [vmem:[%s341 + $0x70] sm:$0xff]
  %v357 = vld [vmem:[%s341 + $0x78] sm:$0xff]
  %s358 = scalar_lea.vmem %s6, 5
  %v359 = vld [vmem:[%s358] sm:$0x1]
  %v361 = vperm.slane %v359, 0
  %363 = vmatpush.msra.mxu0 %v357
  %364 = vmatpush.msra.mxu0 %v356
  %365 = vmatpush.msra.mxu0 %v355
  %366 = vmatpush.msra.mxu0 %v354
  %367 = vmatpush.msra.mxu0 %v353
  %368 = vmatpush.msra.mxu0 %v352
  %369 = vmatpush.msra.mxu0 %v351
  %370 = vmatpush.msra.mxu0 %v350
  %371 = vmatpush.msra.mxu0 %v349
  %372 = vmatpush.msra.mxu0 %v348
  %373 = vmatpush.msra.mxu0 %v347
  %374 = vmatpush.msra.mxu0 %v346
  %375 = vmatpush.msra.mxu0 %v345
  %376 = vmatpush.msra.mxu0 %v344
  %377 = vmatpush.msra.mxu0 %v343
  %378 = vmatpush.msra.mxu0 %v342
  %379 = vmatmul.f32.gmra.mxu0 %v116
  %v380 = vpop.f32.mrf.mxu0
  %v381 = vadd.f32 %v361, %v380
  %382 = vmatmul.f32.gmra.mxu0 %v117
  %v383 = vpop.f32.mrf.mxu0
  %v384 = vadd.f32 %v361, %v383
  %385 = vdwg.mxu0
  %s386 = scalar_lea.vmem %s5, 768
  %v387 = vld [vmem:[%s386] sm:$0xff]
  %v388 = vld [vmem:[%s386 + $0x8] sm:$0xff]
  %v389 = vld [vmem:[%s386 + $0x10] sm:$0xff]
  %v390 = vld [vmem:[%s386 + $0x18] sm:$0xff]
  %v391 = vld [vmem:[%s386 + $0x20] sm:$0xff]
  %v392 = vld [vmem:[%s386 + $0x28] sm:$0xff]
  %v393 = vld [vmem:[%s386 + $0x30] sm:$0xff]
  %v394 = vld [vmem:[%s386 + $0x38] sm:$0xff]
  %v395 = vld [vmem:[%s386 + $0x40] sm:$0xff]
  %v396 = vld [vmem:[%s386 + $0x48] sm:$0xff]
  %v397 = vld [vmem:[%s386 + $0x50] sm:$0xff]
  %v398 = vld [vmem:[%s386 + $0x58] sm:$0xff]
  %v399 = vld [vmem:[%s386 + $0x60] sm:$0xff]
  %v400 = vld [vmem:[%s386 + $0x68] sm:$0xff]
  %v401 = vld [vmem:[%s386 + $0x70] sm:$0xff]
  %v402 = vld [vmem:[%s386 + $0x78] sm:$0xff]
  %s403 = scalar_lea.vmem %s6, 6
  %v404 = vld [vmem:[%s403] sm:$0x1]
  %v406 = vperm.slane %v404, 0
  %408 = vmatpush.msra.mxu0 %v402
  %409 = vmatpush.msra.mxu0 %v401
  %410 = vmatpush.msra.mxu0 %v400
  %411 = vmatpush.msra.mxu0 %v399
  %412 = vmatpush.msra.mxu0 %v398
  %413 = vmatpush.msra.mxu0 %v397
  %414 = vmatpush.msra.mxu0 %v396
  %415 = vmatpush.msra.mxu0 %v395
  %416 = vmatpush.msra.mxu0 %v394
  %417 = vmatpush.msra.mxu0 %v393
  %418 = vmatpush.msra.mxu0 %v392
  %419 = vmatpush.msra.mxu0 %v391
  %420 = vmatpush.msra.mxu0 %v390
  %421 = vmatpush.msra.mxu0 %v389
  %422 = vmatpush.msra.mxu0 %v388
  %423 = vmatpush.msra.mxu0 %v387
  %424 = vmatmul.f32.gmra.mxu0 %v116
  %v425 = vpop.f32.mrf.mxu0
  %v426 = vadd.f32 %v406, %v425
  %427 = vmatmul.f32.gmra.mxu0 %v117
  %v428 = vpop.f32.mrf.mxu0
  %v429 = vadd.f32 %v406, %v428
  %430 = vdwg.mxu0
  %vm431 = vcmask 130048
  %432 = vst.msk [vmem:[%s8] sm:$0xff] %vm431, %v426
  %433 = vst.msk [vmem:[%s8 + $0x8] sm:$0xff] %vm431, %v429
  %v434 = vmul.f32 %v156, %v156
  %v435 = vmul.f32 %v159, %v159
  %v436 = vmul.f32 %v201, %v201
  %v437 = vmul.f32 %v204, %v204
  %v438 = vadd.f32 %v434, %v436
  %v439 = vadd.f32 %v435, %v437
  %v440 = vmul.f32 %v246, %v246
  %v441 = vmul.f32 %v249, %v249
  %v442 = vadd.f32 %v438, %v440
  %v443 = vadd.f32 %v439, %v441
  %v444 = vmax.f32 %v442, 1e-24
  %v445 = vmax.f32 %v443, 1e-24
  %v446 = vrsqrt.pop %v444
  %v447 = vmul.f32 %v446, %v444
  %v448 = vmul.f32 %v447, %v446
  %v449 = vmul.f32 0.5, %v448
  %v450 = vsub.f32 1.5, %v449
  %v451 = vmul.f32 %v446, %v450
  %vm452 = vweird.f32 %v444
  %vm453 = vweird.f32 %v446
  %vm454 = vmor %vm452, %vm453
  %v455 = vsel %vm454, %v446, %v451
  %v456 = vrsqrt.pop %v445
  %v457 = vmul.f32 %v456, %v445
  %v458 = vmul.f32 %v457, %v456
  %v459 = vmul.f32 0.5, %v458
  %v460 = vsub.f32 1.5, %v459
  %v461 = vmul.f32 %v456, %v460
  %vm462 = vweird.f32 %v445
  %vm463 = vweird.f32 %v456
  %vm464 = vmor %vm462, %vm463
  %v465 = vsel %vm464, %v456, %v461
  %v466 = vmul.f32 %v156, %v455
  %v467 = vmul.f32 %v159, %v465
  %v468 = vmul.f32 %v201, %v455
  %v469 = vmul.f32 %v204, %v465
  %v470 = vmul.f32 %v246, %v455
  %v471 = vmul.f32 %v249, %v465
  %v472 = vmul.f32 %v468, %v381
  %v473 = vmul.f32 %v469, %v384
  %v474 = vmul.f32 %v470, %v336
  %v475 = vmul.f32 %v471, %v339
  %v476 = vsub.f32 %v472, %v474
  %v477 = vsub.f32 %v473, %v475
  %v478 = vmul.f32 %v470, %v291
  %v479 = vmul.f32 %v471, %v294
  %v480 = vmul.f32 %v466, %v381
  %v481 = vmul.f32 %v467, %v384
  %v482 = vsub.f32 %v478, %v480
  %v483 = vsub.f32 %v479, %v481
  %v484 = vmul.f32 %v466, %v336
  %v485 = vmul.f32 %v467, %v339
  %v486 = vmul.f32 %v468, %v291
  %v487 = vmul.f32 %v469, %v294
  %v488 = vsub.f32 %v484, %v486
  %v489 = vsub.f32 %v485, %v487
  %v490 = vmul.f32 %v476, %v476
  %v491 = vmul.f32 %v477, %v477
  %v492 = vmul.f32 %v482, %v482
  %v493 = vmul.f32 %v483, %v483
  %v494 = vadd.f32 %v490, %v492
  %v495 = vadd.f32 %v491, %v493
  %v496 = vmul.f32 %v488, %v488
  %v497 = vmul.f32 %v489, %v489
  %v498 = vadd.f32 %v494, %v496
  %v499 = vadd.f32 %v495, %v497
  %v500 = vmax.f32 %v498, 1e-24
  %v501 = vmax.f32 %v499, 1e-24
  %v502 = vrsqrt.pop %v500
  %v503 = vmul.f32 %v502, %v500
  %v504 = vmul.f32 %v503, %v502
  %v505 = vmul.f32 0.5, %v504
  %v506 = vsub.f32 1.5, %v505
  %v507 = vmul.f32 %v502, %v506
  %vm508 = vweird.f32 %v500
  %vm509 = vweird.f32 %v502
  %vm510 = vmor %vm508, %vm509
  %v511 = vsel %vm510, %v502, %v507
  %v512 = vrsqrt.pop %v501
  %v513 = vmul.f32 %v512, %v501
  %v514 = vmul.f32 %v513, %v512
  %v515 = vmul.f32 0.5, %v514
  %v516 = vsub.f32 1.5, %v515
  %v517 = vmul.f32 %v512, %v516
  %vm518 = vweird.f32 %v501
  %vm519 = vweird.f32 %v512
  %vm520 = vmor %vm518, %vm519
  %v521 = vsel %vm520, %v512, %v517
  %v522 = vmul.f32 %v476, %v511
  %v523 = vmul.f32 %v477, %v521
  %v524 = vmul.f32 %v482, %v511
  %v525 = vmul.f32 %v483, %v521
  %v526 = vmul.f32 %v488, %v511
  %v527 = vmul.f32 %v489, %v521
  %v528 = vmul.f32 %v524, %v470
  %v529 = vmul.f32 %v525, %v471
  %v530 = vmul.f32 %v526, %v468
  %v531 = vmul.f32 %v527, %v469
  %v532 = vsub.f32 %v528, %v530
  %v533 = vsub.f32 %v529, %v531
  %v534 = vmul.f32 %v526, %v466
  %v535 = vmul.f32 %v527, %v467
  %v536 = vmul.f32 %v522, %v470
  %v537 = vmul.f32 %v523, %v471
  %v538 = vsub.f32 %v534, %v536
  %v539 = vsub.f32 %v535, %v537
  %v540 = vmul.f32 %v522, %v468
  %v541 = vmul.f32 %v523, %v469
  %v542 = vmul.f32 %v524, %v466
  %v543 = vmul.f32 %v525, %v467
  %v544 = vsub.f32 %v540, %v542
  %v545 = vsub.f32 %v541, %v543
  %546 = vst.msk [vmem:[%s7] sm:$0xff] %vm431, %v466
  %547 = vst.msk [vmem:[%s7 + $0x8] sm:$0xff] %vm431, %v467
  %s548 = scalar_lea.vmem %s7, 16
  %549 = vst.msk [vmem:[%s548] sm:$0xff] %vm431, %v532
  %550 = vst.msk [vmem:[%s548 + $0x8] sm:$0xff] %vm431, %v533
  %s551 = scalar_lea.vmem %s7, 32
  %552 = vst.msk [vmem:[%s551] sm:$0xff] %vm431, %v522
  %553 = vst.msk [vmem:[%s551 + $0x8] sm:$0xff] %vm431, %v523
  %s554 = scalar_lea.vmem %s7, 48
  %555 = vst.msk [vmem:[%s554] sm:$0xff] %vm431, %v468
  %556 = vst.msk [vmem:[%s554 + $0x8] sm:$0xff] %vm431, %v469
  %s557 = scalar_lea.vmem %s7, 64
  %558 = vst.msk [vmem:[%s557] sm:$0xff] %vm431, %v538
  %559 = vst.msk [vmem:[%s557 + $0x8] sm:$0xff] %vm431, %v539
  %s560 = scalar_lea.vmem %s7, 80
  %561 = vst.msk [vmem:[%s560] sm:$0xff] %vm431, %v524
  %562 = vst.msk [vmem:[%s560 + $0x8] sm:$0xff] %vm431, %v525
  %s563 = scalar_lea.vmem %s7, 96
  %564 = vst.msk [vmem:[%s563] sm:$0xff] %vm431, %v470
  %565 = vst.msk [vmem:[%s563 + $0x8] sm:$0xff] %vm431, %v471
  %s566 = scalar_lea.vmem %s7, 112
  %567 = vst.msk [vmem:[%s566] sm:$0xff] %vm431, %v544
  %568 = vst.msk [vmem:[%s566 + $0x8] sm:$0xff] %vm431, %v545
  %s569 = scalar_lea.vmem %s7, 128
  %570 = vst.msk [vmem:[%s569] sm:$0xff] %vm431, %v526
  %571 = vst.msk [vmem:[%s569 + $0x8] sm:$0xff] %vm431, %v527
  // Predicated region
  $region30: #{combine_forward.1} parent=0 // pred_check
    _
  $region31: #{combine_forward.1} parent=0 // pred_check_branch
    %573 = sbr.rel (0) target = $region33
  $region32: #{combine_forward.1} parent=0 // pred_region
    _
  $region33: #{combine_forward.1} parent=0 // pred_fallthru
    _
  // Predicated region
  $region34: #{combine_forward.1} parent=0 // pred_check
    _
  $region35: #{combine_forward.1} parent=0 // pred_check_branch
    %575 = sbr.rel (0) target = $region37
  $region36: #{combine_forward.1} parent=0 // pred_region
    _
  $region37: #{combine_forward.1} parent=0 // pred_fallthru
    _
  // Predicated region
  $region38: #{combine_forward.1} parent=0 // pred_check
    _
  $region39: #{combine_forward.1} parent=0 // pred_check_branch
    %577 = sbr.rel (0) target = $region41
  $region40: #{combine_forward.1} parent=0 // pred_region
    _
  $region41: #{combine_forward.1} parent=0 // pred_fallthru
    _
  // Predicated region
  $region42: #{combine_forward.1} parent=0 // pred_check
    _
  $region43: #{combine_forward.1} parent=0 // pred_check_branch
    %579 = sbr.rel (0) target = $region45
  $region44: #{combine_forward.1} parent=0 // pred_region
    _
  $region45: #{combine_forward.1} parent=0 // pred_fallthru
    _

</llo_original>
